<compile_context>
chip_gen: v7x
topology: tpu7x:2x2x1
jax: 0.10.0
libtpu: 0.0.40
codegen_flags: <defaults>
</compile_context>

<pallas_src>
import jax
import jax.numpy as jnp
from jax.experimental import pallas as pl
from jax.experimental.pallas import tpu as pltpu


def _lstm_chunk_kernel(lens_ref, x_ref, wih_ref, b_ref, whh_ref,
                       wout_ref, bout_ref, out_ref,
                       xw_ref, hbuf_ref, h_ref, c_ref):
    """One grid step = one time chunk of the LSTM recurrence + output Linear.

    lens_ref : (B, 1)      int32  sequence lengths
    x_ref    : (Tc*B, D)   f32    time-major input chunk (rows = t*B + b)
    wih_ref  : (D, 4H)     f32    W_ih^T
    b_ref    : (1, 4H)     f32    b_ih + b_hh
    whh_ref  : (H, 4H)     f32    W_hh^T
    wout_ref : (H, O)      f32    W_out^T
    bout_ref : (1, O)      f32    output bias
    out_ref  : (Tc*B, O)   f32    output chunk (time-major rows)
    xw_ref   : (Tc*B, 4H)  f32    VMEM scratch: fused input projection
    hbuf_ref : (Tc*B, H)   f32    VMEM scratch: masked hidden states
    h_ref    : (B, H)      f32    persistent hidden state (across grid steps)
    c_ref    : (B, H)      f32    persistent cell state   (across grid steps)
    """
    tc_b, _ = x_ref.shape
    B, H = h_ref.shape
    Tc = tc_b // B
    chunk = pl.program_id(0)

    # Zero-init the recurrent state on the first chunk only.
    @pl.when(chunk == 0)
    def _():
        h_ref[...] = jnp.zeros_like(h_ref)
        c_ref[...] = jnp.zeros_like(c_ref)

    # Fused input projection for this chunk: one MXU matmul + bias.
    xw_ref[...] = (jnp.dot(x_ref[...], wih_ref[...],
                           preferred_element_type=jnp.float32)
                   + b_ref[...])

    # Hoist loop-invariant work out of the serial recurrence.
    whh = whh_ref[...]                                   # (H, 4H)
    lens_b = jnp.broadcast_to(lens_ref[...], (B, H))     # (B, H) int32, hoisted
    t0 = chunk * Tc                                      # global time offset

    def step(t, carry):
        h, c = carry
        row = pl.multiple_of(t * B, B)                   # sublane-aligned start
        # Per-step serial work: one small MXU push + gate math.
        gates = xw_ref[pl.ds(row, B), :] + jnp.dot(
            h, whh, preferred_element_type=jnp.float32)  # (B, 4H)

        # Full-vreg EUP nonlinearities, then gate slices (PyTorch order i,f,g,o).
        sg = jax.nn.sigmoid(gates)
        tg = jnp.tanh(gates)
        i_g = sg[:, 0 * H:1 * H]
        f_g = sg[:, 1 * H:2 * H]
        g_g = tg[:, 2 * H:3 * H]
        o_g = sg[:, 3 * H:4 * H]

        c_new = f_g * c + i_g * g_g
        h_new = o_g * jnp.tanh(c_new)

        m = (t0 + t) < lens_b                            # (B, H) bool -> vsel
        hbuf_ref[pl.ds(row, B), :] = jnp.where(m, h_new, 0.0)
        return jnp.where(m, h_new, h), jnp.where(m, c_new, c)

    # Tc is small; full unroll keeps LLO visibility.  Use a bounded unroll
    # (4..8) if the per-chunk trip count grows.
    h_fin, c_fin = jax.lax.fori_loop(0, Tc, step, (h_ref[...], c_ref[...]),
                                     unroll=True)
    h_ref[...] = h_fin
    c_ref[...] = c_fin

    # Output Linear for the whole chunk: one matmul + one slab store.
    out_ref[...] = (jnp.dot(hbuf_ref[...], wout_ref[...],
                            preferred_element_type=jnp.float32)
                    + bout_ref[...])


def _pick_time_chunk(T, B, D, G, H, O, vmem_budget_bytes=8 * 1024 * 1024):
    """Largest Tc (dividing T) whose resident f32 footprint fits the budget.

    Counts double-buffered x/out blocks plus the xw / hbuf scratch.  Re-derive
    the budget per generation (v7x: 64 MiB physical / 32 MiB scoped default;
    v5e: 16 MiB scoped default).
    """
    per_step = 4 * B * (2 * D + G + H + 2 * O)
    tc = max(1, min(T, vmem_budget_bytes // max(per_step, 1)))
    while T % tc:
        tc -= 1
    return tc


def rnn_module_forward(batch, batch_lens, params, *, time_chunk=None):
    """JAX/Pallas equivalent of RNNModule.forward.

    batch:      (B, T, D) float32 (batch_first, like the PyTorch module)
    batch_lens: (B,) int, max(batch_lens) == T
    params:     dict with wih_T (D,4H), whh_T (H,4H), b (1,4H),
                wout_T (H,O), bout (1,O)
    returns:    (B, T, O) float32
    """
    B, T, D = batch.shape
    H = params["whh_T"].shape[0]
    O = params["wout_T"].shape[1]
    G = 4 * H

    Tc = time_chunk if time_chunk is not None else _pick_time_chunk(
        T, B, D, G, H, O)
    assert T % Tc == 0, "time_chunk must divide T"

    # Transpose the cheap D-wide input to time-major and flatten: row = t*B + b.
    x_tm = jnp.transpose(batch, (1, 0, 2)).reshape(T * B, D)
    lens = batch_lens.astype(jnp.int32).reshape(B, 1)

    out_flat = pl.pallas_call(
        _lstm_chunk_kernel,
        out_shape=jax.ShapeDtypeStruct((T * B, O), jnp.float32),
        grid_spec=pltpu.PrefetchScalarGridSpec(
            num_scalar_prefetch=0,
            grid=(T // Tc,),                                  # time chunks
            in_specs=[
                pl.BlockSpec((B, 1), lambda c: (0, 0)),       # lens (resident)
                pl.BlockSpec((Tc * B, D), lambda c: (c, 0)),  # x chunk (pipelined)
                pl.BlockSpec((D, G), lambda c: (0, 0)),       # W_ih^T (resident)
                pl.BlockSpec((1, G), lambda c: (0, 0)),       # b_ih + b_hh
                pl.BlockSpec((H, G), lambda c: (0, 0)),       # W_hh^T (resident)
                pl.BlockSpec((H, O), lambda c: (0, 0)),       # W_out^T (resident)
                pl.BlockSpec((1, O), lambda c: (0, 0)),       # b_out
            ],
            out_specs=pl.BlockSpec((Tc * B, O), lambda c: (c, 0)),
            scratch_shapes=[
                pltpu.VMEM((Tc * B, G), jnp.float32),  # fused input projection
                pltpu.VMEM((Tc * B, H), jnp.float32),  # masked hidden states
                pltpu.VMEM((B, H), jnp.float32),       # persistent h
                pltpu.VMEM((B, H), jnp.float32),       # persistent c
            ],
        ),
        compiler_params=pltpu.CompilerParams(
            # Sequential carry (h, c) across chunks -> must be "arbitrary".
            dimension_semantics=("arbitrary",),
            # Explicit scoped-VMEM limit (v5e default is only 16 MiB).
            vmem_limit_bytes=32 * 1024 * 1024,
        ),
    )(lens, x_tm, params["wih_T"], params["b"], params["whh_T"],
      params["wout_T"], params["bout"])

    # (T*B, O) time-major flat -> (B, T, O) batch-first, like the PyTorch module.
    return out_flat.reshape(T, B, O).transpose(1, 0, 2)


def _reference_forward(batch, batch_lens, params):
    """Pure-JAX reference (lax.scan) for correctness checking."""
    B, T, D = batch.shape
    H = params["whh_T"].shape[0]
    x_tm = jnp.transpose(batch, (1, 0, 2))
    lens = batch_lens.astype(jnp.int32)

    def step(carry, inp):
        h, c = carry
        t, x_t = inp
        gates = x_t @ params["wih_T"] + h @ params["whh_T"] + params["b"]
        i = jax.nn.sigmoid(gates[:, 0 * H:1 * H])
        f = jax.nn.sigmoid(gates[:, 1 * H:2 * H])
        g = jnp.tanh(gates[:, 2 * H:3 * H])
        o = jax.nn.sigmoid(gates[:, 3 * H:4 * H])
        c_new = f * c + i * g
        h_new = o * jnp.tanh(c_new)
        mask = (t < lens).astype(jnp.float32)[:, None]
        h_u = mask * h_new + (1.0 - mask) * h
        c_u = mask * c_new + (1.0 - mask) * c
        return (h_u, c_u), mask * h_new

    init = (jnp.zeros((B, H), jnp.float32), jnp.zeros((B, H), jnp.float32))
    _, hs = jax.lax.scan(step, init, (jnp.arange(T), x_tm))
    hs = jnp.transpose(hs, (1, 0, 2))              # (B, T, H)
    y = hs.reshape(-1, H) @ params["wout_T"] + params["bout"]
    return y.reshape(B, T, -1)


def make_params(key, input_size, hidden_size, output_size):
    """Deterministic LSTM + Linear parameters (PyTorch-style uniform init)."""
    k = 1.0 / jnp.sqrt(hidden_size)
    ks = jax.random.split(key, 6)
    wih = jax.random.uniform(ks[0], (4 * hidden_size, input_size),
                             jnp.float32, -k, k)
    whh = jax.random.uniform(ks[1], (4 * hidden_size, hidden_size),
                             jnp.float32, -k, k)
    b_ih = jax.random.uniform(ks[2], (4 * hidden_size,), jnp.float32, -k, k)
    b_hh = jax.random.uniform(ks[3], (4 * hidden_size,), jnp.float32, -k, k)
    wout = jax.random.uniform(ks[4], (output_size, hidden_size),
                              jnp.float32, -k, k)
    bout = jax.random.uniform(ks[5], (output_size,), jnp.float32, -k, k)
    return {
        "wih_T": wih.T,                              # (D, 4H)
        "whh_T": whh.T,                              # (H, 4H)
        "b": (b_ih + b_hh).reshape(1, -1),           # (1, 4H)
        "wout_T": wout.T,                            # (H, O)
        "bout": bout.reshape(1, -1),                 # (1, O)
    }


if __name__ == "__main__":
    B, T, D, H, O = 8, 8, 16, 32, 16   # 4H = 128 -> lane-aligned gate block

    key = jax.random.PRNGKey(0)
    k_param, k_x = jax.random.split(key)
    params = make_params(k_param, D, H, O)

    batch = jax.random.normal(k_x, (B, T, D), jnp.float32)
    # max(batch_lens) == T so the final .view(batch, seq_len, -1) is consistent
    # with pad_packed_sequence (same assumption as the PyTorch module).
    batch_lens = jnp.array([8, 5, 8, 3, 6, 8, 2, 7], dtype=jnp.int32)
    assert int(jnp.max(batch_lens)) == T, "max(batch_lens) must equal seq_len"

    ref = _reference_forward(batch, batch_lens, params)

    # Multi-chunk path (persistent h/c scratch across grid steps).
    out = rnn_module_forward(batch, batch_lens, params, time_chunk=4)
    out = jax.block_until_ready(out)
    assert out.shape == (B, T, O)
    assert jnp.allclose(out, ref, atol=1e-5, rtol=1e-5)

    # Single-chunk path (whole sequence in one grid step) for coverage.
    out1 = rnn_module_forward(batch, batch_lens, params, time_chunk=T)
    out1 = jax.block_until_ready(out1)
    assert jnp.allclose(out1, ref, atol=1e-5, rtol=1e-5)

    print("KERNEL_OK")
</pallas_src>

<mosaic_0001>
module attributes {stable_mosaic.version = 11 : i64} {
  func.func @_lstm_chunk_kernel(%arg0: i32, %arg1: memref<8x1xi32, #tpu.memory_space<vmem>>, %arg2: memref<32x16xf32, #tpu.memory_space<vmem>>, %arg3: memref<16x128xf32, #tpu.memory_space<vmem>>, %arg4: memref<1x128xf32, #tpu.memory_space<vmem>>, %arg5: memref<32x128xf32, #tpu.memory_space<vmem>>, %arg6: memref<32x16xf32, #tpu.memory_space<vmem>>, %arg7: memref<1x16xf32, #tpu.memory_space<vmem>>, %arg8: memref<32x16xf32, #tpu.memory_space<vmem>>, %arg9: memref<32x128xf32, #tpu.memory_space<vmem>>, %arg10: memref<32x32xf32, #tpu.memory_space<vmem>>, %arg11: memref<8x32xf32, #tpu.memory_space<vmem>>, %arg12: memref<8x32xf32, #tpu.memory_space<vmem>>) attributes {dimension_semantics = [#tpu.dimension_semantics<arbitrary>], iteration_bounds = array<i64: 2>, scalar_prefetch = 0 : i64, scratch_operands = 4 : i64, tpu.core_type = #tpu.core_type<tc>, window_params = [{pipeline_mode = #tpu.pipeline_mode<synchronous>, transform_indices = @transform_0, window_bounds = array<i64: 8, 1>}, {transform_indices = @transform_1, window_bounds = array<i64: 32, 16>}, {pipeline_mode = #tpu.pipeline_mode<synchronous>, transform_indices = @transform_2, window_bounds = array<i64: 16, 128>}, {pipeline_mode = #tpu.pipeline_mode<synchronous>, transform_indices = @transform_3, window_bounds = array<i64: 1, 128>}, {pipeline_mode = #tpu.pipeline_mode<synchronous>, transform_indices = @transform_4, window_bounds = array<i64: 32, 128>}, {pipeline_mode = #tpu.pipeline_mode<synchronous>, transform_indices = @transform_5, window_bounds = array<i64: 32, 16>}, {pipeline_mode = #tpu.pipeline_mode<synchronous>, transform_indices = @transform_6, window_bounds = array<i64: 1, 16>}, {transform_indices = @transform_7, window_bounds = array<i64: 32, 16>}]} {
    %c0_i32 = arith.constant 0 : i32
    %0 = arith.cmpi eq, %arg0, %c0_i32 : i32
    %1 = arith.extui %0 : i1 to i32
    %c0_i32_0 = arith.constant 0 : i32
    %2 = arith.cmpi ne, %1, %c0_i32_0 : i32
    scf.if %2 {
      %cst_54 = arith.constant 0.000000e+00 : f32
      %146 = vector.broadcast %cst_54 : f32 to vector<8x32xf32>
      %c0_55 = arith.constant 0 : index
      %c0_56 = arith.constant 0 : index
      %147 = vector.load %arg11[%c0_55, %c0_56] : memref<8x32xf32, #tpu.memory_space<vmem>>, vector<8x32xf32>
      tpu.vector_store %arg11[%c0_55, %c0_56], %146 {strides = array<i32>} : memref<8x32xf32, #tpu.memory_space<vmem>>, vector<8x32xf32>,
      %cst_57 = arith.constant 0.000000e+00 : f32
      %148 = vector.broadcast %cst_57 : f32 to vector<8x32xf32>
      %c0_58 = arith.constant 0 : index
      %c0_59 = arith.constant 0 : index
      %149 = vector.load %arg12[%c0_58, %c0_59] : memref<8x32xf32, #tpu.memory_space<vmem>>, vector<8x32xf32>
      tpu.vector_store %arg12[%c0_58, %c0_59], %148 {strides = array<i32>} : memref<8x32xf32, #tpu.memory_space<vmem>>, vector<8x32xf32>,
    } else {
    }
    %c0 = arith.constant 0 : index
    %c0_1 = arith.constant 0 : index
    %3 = vector.load %arg2[%c0, %c0_1] : memref<32x16xf32, #tpu.memory_space<vmem>>, vector<32x16xf32>
    %c0_2 = arith.constant 0 : index
    %c0_3 = arith.constant 0 : index
    %4 = vector.load %arg3[%c0_2, %c0_3] : memref<16x128xf32, #tpu.memory_space<vmem>>, vector<16x128xf32>
    %cst = arith.constant dense<0.000000e+00> : vector<32x128xf32>
    %5 = tpu.matmul %3, %4, %cst {dimension_numbers = #tpu.dot_dimension_numbers<[1], [0], [0], [1], [0, 0, 1, 1], [], []>} : vector<32x16xf32>, vector<16x128xf32>, vector<32x128xf32> -> vector<32x128xf32>
    %c0_4 = arith.constant 0 : index
    %c0_5 = arith.constant 0 : index
    %6 = vector.load %arg4[%c0_4, %c0_5] : memref<1x128xf32, #tpu.memory_space<vmem>>, vector<1x128xf32>
    %7 = vector.broadcast %6 : vector<1x128xf32> to vector<32x128xf32>
    %8 = arith.addf %5, %7 : vector<32x128xf32>
    %c0_6 = arith.constant 0 : index
    %c0_7 = arith.constant 0 : index
    %9 = vector.load %arg9[%c0_6, %c0_7] : memref<32x128xf32, #tpu.memory_space<vmem>>, vector<32x128xf32>
    tpu.vector_store %arg9[%c0_6, %c0_7], %8 {strides = array<i32>} : memref<32x128xf32, #tpu.memory_space<vmem>>, vector<32x128xf32>,
    %c0_8 = arith.constant 0 : index
    %c0_9 = arith.constant 0 : index
    %10 = vector.load %arg5[%c0_8, %c0_9] : memref<32x128xf32, #tpu.memory_space<vmem>>, vector<32x128xf32>
    %c0_10 = arith.constant 0 : index
    %c0_11 = arith.constant 0 : index
    %11 = vector.load %arg1[%c0_10, %c0_11] : memref<8x1xi32, #tpu.memory_space<vmem>>, vector<8x1xi32>
    %12 = vector.shape_cast %11 : vector<8x1xi32> to vector<8x1xi32>
    %13 = vector.broadcast %12 : vector<8x1xi32> to vector<8x32xi32>
    %c4_i32 = arith.constant 4 : i32
    %14 = arith.muli %arg0, %c4_i32 : i32
    %c0_12 = arith.constant 0 : index
    %c0_13 = arith.constant 0 : index
    %15 = vector.load %arg11[%c0_12, %c0_13] : memref<8x32xf32, #tpu.memory_space<vmem>>, vector<8x32xf32>
    %c0_14 = arith.constant 0 : index
    %c0_15 = arith.constant 0 : index
    %16 = vector.load %arg12[%c0_14, %c0_15] : memref<8x32xf32, #tpu.memory_space<vmem>>, vector<8x32xf32>
    %c0_i32_16 = arith.constant 0 : i32
    %c8_i32 = arith.constant 8 : i32
    %17 = arith.muli %c0_i32_16, %c8_i32 : i32
    %18 = tpu.assume_multiple %17, 8 : i32
    %19 = arith.index_cast %18 : i32 to index
    %c0_17 = arith.constant 0 : index
    %20 = vector.load %arg9[%19, %c0_17] : memref<32x128xf32, #tpu.memory_space<vmem>>, vector<8x128xf32>
    %cst_18 = arith.constant dense<0.000000e+00> : vector<8x128xf32>
    %21 = tpu.matmul %15, %10, %cst_18 {dimension_numbers = #tpu.dot_dimension_numbers<[1], [0], [0], [1], [0, 0, 1, 1], [], []>} : vector<8x32xf32>, vector<32x128xf32>, vector<8x128xf32> -> vector<8x128xf32>
    %22 = arith.addf %20, %21 : vector<8x128xf32>
    %23 = arith.negf %22 : vector<8x128xf32>
    %24 = math.exp %23 : vector<8x128xf32>
    %cst_19 = arith.constant 1.000000e+00 : f32
    %25 = vector.broadcast %cst_19 : f32 to vector<8x128xf32>
    %26 = arith.addf %25, %24 : vector<8x128xf32>
    %27 = arith.divf %25, %26 : vector<8x128xf32>
    %28 = math.tanh %22 : vector<8x128xf32>
    %29 = vector.extract_strided_slice %27 {offsets = [0, 0], sizes = [8, 32], strides = [1, 1]} : vector<8x128xf32> to vector<8x32xf32>
    %30 = vector.extract_strided_slice %27 {offsets = [0, 32], sizes = [8, 32], strides = [1, 1]} : vector<8x128xf32> to vector<8x32xf32>
    %31 = vector.extract_strided_slice %28 {offsets = [0, 64], sizes = [8, 32], strides = [1, 1]} : vector<8x128xf32> to vector<8x32xf32>
    %32 = vector.extract_strided_slice %27 {offsets = [0, 96], sizes = [8, 32], strides = [1, 1]} : vector<8x128xf32> to vector<8x32xf32>
    %33 = arith.mulf %30, %16 : vector<8x32xf32>
    %34 = arith.mulf %29, %31 : vector<8x32xf32>
    %35 = arith.addf %33, %34 : vector<8x32xf32>
    %36 = math.tanh %35 : vector<8x32xf32>
    %37 = arith.mulf %32, %36 : vector<8x32xf32>
    %38 = arith.addi %14, %c0_i32_16 : i32
    %39 = vector.broadcast %38 : i32 to vector<8x32xi32>
    %40 = arith.cmpi slt, %39, %13 : vector<8x32xi32>
    %cst_20 = arith.constant 0.000000e+00 : f32
    %41 = vector.broadcast %cst_20 : f32 to vector<8x32xf32>
    %42 = arith.select %40, %37, %41 : vector<8x32xi1>, vector<8x32xf32>
    %43 = arith.index_cast %18 : i32 to index
    %c0_21 = arith.constant 0 : index
    %44 = vector.load %arg10[%43, %c0_21] : memref<32x32xf32, #tpu.memory_space<vmem>>, vector<8x32xf32>
    tpu.vector_store %arg10[%43, %c0_21], %42 {strides = array<i32>} : memref<32x32xf32, #tpu.memory_space<vmem>>, vector<8x32xf32>,
    %45 = arith.select %40, %37, %15 : vector<8x32xi1>, vector<8x32xf32>
    %46 = arith.select %40, %35, %16 : vector<8x32xi1>, vector<8x32xf32>
    %c1_i32 = arith.constant 1 : i32
    %c8_i32_22 = arith.constant 8 : i32
    %47 = arith.muli %c1_i32, %c8_i32_22 : i32
    %48 = tpu.assume_multiple %47, 8 : i32
    %49 = arith.index_cast %48 : i32 to index
    %c0_23 = arith.constant 0 : index
    %50 = vector.load %arg9[%49, %c0_23] : memref<32x128xf32, #tpu.memory_space<vmem>>, vector<8x128xf32>
    %cst_24 = arith.constant dense<0.000000e+00> : vector<8x128xf32>
    %51 = tpu.matmul %45, %10, %cst_24 {dimension_numbers = #tpu.dot_dimension_numbers<[1], [0], [0], [1], [0, 0, 1, 1], [], []>} : vector<8x32xf32>, vector<32x128xf32>, vector<8x128xf32> -> vector<8x128xf32>
    %52 = arith.addf %50, %51 : vector<8x128xf32>
    %53 = arith.negf %52 : vector<8x128xf32>
    %54 = math.exp %53 : vector<8x128xf32>
    %cst_25 = arith.constant 1.000000e+00 : f32
    %55 = vector.broadcast %cst_25 : f32 to vector<8x128xf32>
    %56 = arith.addf %55, %54 : vector<8x128xf32>
    %57 = arith.divf %55, %56 : vector<8x128xf32>
    %58 = math.tanh %52 : vector<8x128xf32>
    %59 = vector.extract_strided_slice %57 {offsets = [0, 0], sizes = [8, 32], strides = [1, 1]} : vector<8x128xf32> to vector<8x32xf32>
    %60 = vector.extract_strided_slice %57 {offsets = [0, 32], sizes = [8, 32], strides = [1, 1]} : vector<8x128xf32> to vector<8x32xf32>
    %61 = vector.extract_strided_slice %58 {offsets = [0, 64], sizes = [8, 32], strides = [1, 1]} : vector<8x128xf32> to vector<8x32xf32>
    %62 = vector.extract_strided_slice %57 {offsets = [0, 96], sizes = [8, 32], strides = [1, 1]} : vector<8x128xf32> to vector<8x32xf32>
    %63 = arith.mulf %60, %46 : vector<8x32xf32>
    %64 = arith.mulf %59, %61 : vector<8x32xf32>
    %65 = arith.addf %63, %64 : vector<8x32xf32>
    %66 = math.tanh %65 : vector<8x32xf32>
    %67 = arith.mulf %62, %66 : vector<8x32xf32>
    %68 = arith.addi %14, %c1_i32 : i32
    %69 = vector.broadcast %68 : i32 to vector<8x32xi32>
    %70 = arith.cmpi slt, %69, %13 : vector<8x32xi32>
    %cst_26 = arith.constant 0.000000e+00 : f32
    %71 = vector.broadcast %cst_26 : f32 to vector<8x32xf32>
    %72 = arith.select %70, %67, %71 : vector<8x32xi1>, vector<8x32xf32>
    %73 = arith.index_cast %48 : i32 to index
    %c0_27 = arith.constant 0 : index
    %74 = vector.load %arg10[%73, %c0_27] : memref<32x32xf32, #tpu.memory_space<vmem>>, vector<8x32xf32>
    tpu.vector_store %arg10[%73, %c0_27], %72 {strides = array<i32>} : memref<32x32xf32, #tpu.memory_space<vmem>>, vector<8x32xf32>,
    %75 = arith.select %70, %67, %45 : vector<8x32xi1>, vector<8x32xf32>
    %76 = arith.select %70, %65, %46 : vector<8x32xi1>, vector<8x32xf32>
    %c2_i32 = arith.constant 2 : i32
    %c8_i32_28 = arith.constant 8 : i32
    %77 = arith.muli %c2_i32, %c8_i32_28 : i32
    %78 = tpu.assume_multiple %77, 8 : i32
    %79 = arith.index_cast %78 : i32 to index
    %c0_29 = arith.constant 0 : index
    %80 = vector.load %arg9[%79, %c0_29] : memref<32x128xf32, #tpu.memory_space<vmem>>, vector<8x128xf32>
    %cst_30 = arith.constant dense<0.000000e+00> : vector<8x128xf32>
    %81 = tpu.matmul %75, %10, %cst_30 {dimension_numbers = #tpu.dot_dimension_numbers<[1], [0], [0], [1], [0, 0, 1, 1], [], []>} : vector<8x32xf32>, vector<32x128xf32>, vector<8x128xf32> -> vector<8x128xf32>
    %82 = arith.addf %80, %81 : vector<8x128xf32>
    %83 = arith.negf %82 : vector<8x128xf32>
    %84 = math.exp %83 : vector<8x128xf32>
    %cst_31 = arith.constant 1.000000e+00 : f32
    %85 = vector.broadcast %cst_31 : f32 to vector<8x128xf32>
    %86 = arith.addf %85, %84 : vector<8x128xf32>
    %87 = arith.divf %85, %86 : vector<8x128xf32>
    %88 = math.tanh %82 : vector<8x128xf32>
    %89 = vector.extract_strided_slice %87 {offsets = [0, 0], sizes = [8, 32], strides = [1, 1]} : vector<8x128xf32> to vector<8x32xf32>
    %90 = vector.extract_strided_slice %87 {offsets = [0, 32], sizes = [8, 32], strides = [1, 1]} : vector<8x128xf32> to vector<8x32xf32>
    %91 = vector.extract_strided_slice %88 {offsets = [0, 64], sizes = [8, 32], strides = [1, 1]} : vector<8x128xf32> to vector<8x32xf32>
    %92 = vector.extract_strided_slice %87 {offsets = [0, 96], sizes = [8, 32], strides = [1, 1]} : vector<8x128xf32> to vector<8x32xf32>
    %93 = arith.mulf %90, %76 : vector<8x32xf32>
    %94 = arith.mulf %89, %91 : vector<8x32xf32>
    %95 = arith.addf %93, %94 : vector<8x32xf32>
    %96 = math.tanh %95 : vector<8x32xf32>
    %97 = arith.mulf %92, %96 : vector<8x32xf32>
    %98 = arith.addi %14, %c2_i32 : i32
    %99 = vector.broadcast %98 : i32 to vector<8x32xi32>
    %100 = arith.cmpi slt, %99, %13 : vector<8x32xi32>
    %cst_32 = arith.constant 0.000000e+00 : f32
    %101 = vector.broadcast %cst_32 : f32 to vector<8x32xf32>
    %102 = arith.select %100, %97, %101 : vector<8x32xi1>, vector<8x32xf32>
    %103 = arith.index_cast %78 : i32 to index
    %c0_33 = arith.constant 0 : index
    %104 = vector.load %arg10[%103, %c0_33] : memref<32x32xf32, #tpu.memory_space<vmem>>, vector<8x32xf32>
    tpu.vector_store %arg10[%103, %c0_33], %102 {strides = array<i32>} : memref<32x32xf32, #tpu.memory_space<vmem>>, vector<8x32xf32>,
    %105 = arith.select %100, %97, %75 : vector<8x32xi1>, vector<8x32xf32>
    %106 = arith.select %100, %95, %76 : vector<8x32xi1>, vector<8x32xf32>
    %c3_i32 = arith.constant 3 : i32
    %c8_i32_34 = arith.constant 8 : i32
    %107 = arith.muli %c3_i32, %c8_i32_34 : i32
    %108 = tpu.assume_multiple %107, 8 : i32
    %109 = arith.index_cast %108 : i32 to index
    %c0_35 = arith.constant 0 : index
    %110 = vector.load %arg9[%109, %c0_35] : memref<32x128xf32, #tpu.memory_space<vmem>>, vector<8x128xf32>
    %cst_36 = arith.constant dense<0.000000e+00> : vector<8x128xf32>
    %111 = tpu.matmul %105, %10, %cst_36 {dimension_numbers = #tpu.dot_dimension_numbers<[1], [0], [0], [1], [0, 0, 1, 1], [], []>} : vector<8x32xf32>, vector<32x128xf32>, vector<8x128xf32> -> vector<8x128xf32>
    %112 = arith.addf %110, %111 : vector<8x128xf32>
    %113 = arith.negf %112 : vector<8x128xf32>
    %114 = math.exp %113 : vector<8x128xf32>
    %cst_37 = arith.constant 1.000000e+00 : f32
    %115 = vector.broadcast %cst_37 : f32 to vector<8x128xf32>
    %116 = arith.addf %115, %114 : vector<8x128xf32>
    %117 = arith.divf %115, %116 : vector<8x128xf32>
    %118 = math.tanh %112 : vector<8x128xf32>
    %119 = vector.extract_strided_slice %117 {offsets = [0, 0], sizes = [8, 32], strides = [1, 1]} : vector<8x128xf32> to vector<8x32xf32>
    %120 = vector.extract_strided_slice %117 {offsets = [0, 32], sizes = [8, 32], strides = [1, 1]} : vector<8x128xf32> to vector<8x32xf32>
    %121 = vector.extract_strided_slice %118 {offsets = [0, 64], sizes = [8, 32], strides = [1, 1]} : vector<8x128xf32> to vector<8x32xf32>
    %122 = vector.extract_strided_slice %117 {offsets = [0, 96], sizes = [8, 32], strides = [1, 1]} : vector<8x128xf32> to vector<8x32xf32>
    %123 = arith.mulf %120, %106 : vector<8x32xf32>
    %124 = arith.mulf %119, %121 : vector<8x32xf32>
    %125 = arith.addf %123, %124 : vector<8x32xf32>
    %126 = math.tanh %125 : vector<8x32xf32>
    %127 = arith.mulf %122, %126 : vector<8x32xf32>
    %128 = arith.addi %14, %c3_i32 : i32
    %129 = vector.broadcast %128 : i32 to vector<8x32xi32>
    %130 = arith.cmpi slt, %129, %13 : vector<8x32xi32>
    %cst_38 = arith.constant 0.000000e+00 : f32
    %131 = vector.broadcast %cst_38 : f32 to vector<8x32xf32>
    %132 = arith.select %130, %127, %131 : vector<8x32xi1>, vector<8x32xf32>
    %133 = arith.index_cast %108 : i32 to index
    %c0_39 = arith.constant 0 : index
    %134 = vector.load %arg10[%133, %c0_39] : memref<32x32xf32, #tpu.memory_space<vmem>>, vector<8x32xf32>
    tpu.vector_store %arg10[%133, %c0_39], %132 {strides = array<i32>} : memref<32x32xf32, #tpu.memory_space<vmem>>, vector<8x32xf32>,
    %135 = arith.select %130, %127, %105 : vector<8x32xi1>, vector<8x32xf32>
    %136 = arith.select %130, %125, %106 : vector<8x32xi1>, vector<8x32xf32>
    %c4_i32_40 = arith.constant 4 : i32
    %c0_41 = arith.constant 0 : index
    %c0_42 = arith.constant 0 : index
    %137 = vector.load %arg11[%c0_41, %c0_42] : memref<8x32xf32, #tpu.memory_space<vmem>>, vector<8x32xf32>
    tpu.vector_store %arg11[%c0_41, %c0_42], %135 {strides = array<i32>} : memref<8x32xf32, #tpu.memory_space<vmem>>, vector<8x32xf32>,
    %c0_43 = arith.constant 0 : index
    %c0_44 = arith.constant 0 : index
    %138 = vector.load %arg12[%c0_43, %c0_44] : memref<8x32xf32, #tpu.memory_space<vmem>>, vector<8x32xf32>
    tpu.vector_store %arg12[%c0_43, %c0_44], %136 {strides = array<i32>} : memref<8x32xf32, #tpu.memory_space<vmem>>, vector<8x32xf32>,
    %c0_45 = arith.constant 0 : index
    %c0_46 = arith.constant 0 : index
    %139 = vector.load %arg10[%c0_45, %c0_46] : memref<32x32xf32, #tpu.memory_space<vmem>>, vector<32x32xf32>
    %c0_47 = arith.constant 0 : index
    %c0_48 = arith.constant 0 : index
    %140 = vector.load %arg6[%c0_47, %c0_48] : memref<32x16xf32, #tpu.memory_space<vmem>>, vector<32x16xf32>
    %cst_49 = arith.constant dense<0.000000e+00> : vector<32x16xf32>
    %141 = tpu.matmul %139, %140, %cst_49 {dimension_numbers = #tpu.dot_dimension_numbers<[1], [0], [0], [1], [0, 0, 1, 1], [], []>} : vector<32x32xf32>, vector<32x16xf32>, vector<32x16xf32> -> vector<32x16xf32>
    %c0_50 = arith.constant 0 : index
    %c0_51 = arith.constant 0 : index
    %142 = vector.load %arg7[%c0_50, %c0_51] : memref<1x16xf32, #tpu.memory_space<vmem>>, vector<1x16xf32>
    %143 = vector.broadcast %142 : vector<1x16xf32> to vector<32x16xf32>
    %144 = arith.addf %141, %143 : vector<32x16xf32>
    %c0_52 = arith.constant 0 : index
    %c0_53 = arith.constant 0 : index
    %145 = vector.load %arg8[%c0_52, %c0_53] : memref<32x16xf32, #tpu.memory_space<vmem>>, vector<32x16xf32>
    tpu.vector_store %arg8[%c0_52, %c0_53], %144 {strides = array<i32>} : memref<32x16xf32, #tpu.memory_space<vmem>>, vector<32x16xf32>,
    return
  }
  func.func @transform_0(%arg0: i32) -> (i32, i32) {
    %c0_i32 = arith.constant 0 : i32
    %c0_i32_0 = arith.constant 0 : i32
    %c0_i32_1 = arith.constant 0 : i32
    return %c0_i32, %c0_i32_0 : i32, i32
  }
  func.func @transform_1(%arg0: i32) -> (i32, i32) {
    %c0_i32 = arith.constant 0 : i32
    %c0_i32_0 = arith.constant 0 : i32
    return %arg0, %c0_i32 : i32, i32
  }
  func.func @transform_2(%arg0: i32) -> (i32, i32) {
    %c0_i32 = arith.constant 0 : i32
    %c0_i32_0 = arith.constant 0 : i32
    %c0_i32_1 = arith.constant 0 : i32
    return %c0_i32, %c0_i32_0 : i32, i32
  }
  func.func @transform_3(%arg0: i32) -> (i32, i32) {
    %c0_i32 = arith.constant 0 : i32
    %c0_i32_0 = arith.constant 0 : i32
    %c0_i32_1 = arith.constant 0 : i32
    return %c0_i32, %c0_i32_0 : i32, i32
  }
  func.func @transform_4(%arg0: i32) -> (i32, i32) {
    %c0_i32 = arith.constant 0 : i32
    %c0_i32_0 = arith.constant 0 : i32
    %c0_i32_1 = arith.constant 0 : i32
    return %c0_i32, %c0_i32_0 : i32, i32
  }
  func.func @transform_5(%arg0: i32) -> (i32, i32) {
    %c0_i32 = arith.constant 0 : i32
    %c0_i32_0 = arith.constant 0 : i32
    %c0_i32_1 = arith.constant 0 : i32
    return %c0_i32, %c0_i32_0 : i32, i32
  }
  func.func @transform_6(%arg0: i32) -> (i32, i32) {
    %c0_i32 = arith.constant 0 : i32
    %c0_i32_0 = arith.constant 0 : i32
    %c0_i32_1 = arith.constant 0 : i32
    return %c0_i32, %c0_i32_0 : i32, i32
  }
  func.func @transform_7(%arg0: i32) -> (i32, i32) {
    %c0_i32 = arith.constant 0 : i32
    %c0_i32_0 = arith.constant 0 : i32
    return %arg0, %c0_i32 : i32, i32
  }
}

</mosaic_0001>

<llo_original>
// kernel: tpu_custom_call.1
$region0: #{tpu_custom_call.1}
  #allocation0 [shape = 'u32[]', space=smem, size = 0x4, offset = 0x4, fixed_abs, tag = 'smem constant byte address 0x4 - core index']
  #allocation1 [shape = 'u32[144,128]{1,0:T(1,128)}', space=vmem, size = 0x12000, scoped, tag = 'internal scratch']
  #allocation2 [shape = 'f32[32,128]{1,0:T(8,128)}', space=vmem, size = 0x4000, scoped, tag = 'scratch operand']
  #allocation3 [shape = 'f32[32,32]{1,0:T(8,128)}', space=vmem, size = 0x4000, scoped, tag = 'scratch operand']
  #allocation4 [shape = 'f32[8,32]{1,0:T(8,128)}', space=vmem, size = 0x1000, scoped, tag = 'scratch operand']
  #allocation5 [shape = 'f32[8,32]{1,0:T(8,128)}', space=vmem, size = 0x1000, scoped, tag = 'scratch operand']
  %s0 = inlined_call_operand.vmem [shape: s32[8,1], index: 0, kind: input, shape index: {}]
  %s1 = inlined_call_operand.vmem [shape: f32[64,16], index: 1, kind: input, shape index: {}]
  %s2 = inlined_call_operand.vmem [shape: f32[16,128], index: 2, kind: input, shape index: {}]
  %s3 = inlined_call_operand.vmem [shape: f32[1,128], index: 3, kind: input, shape index: {}]
  %s4 = inlined_call_operand.vmem [shape: f32[32,128], index: 4, kind: input, shape index: {}]
  %s5 = inlined_call_operand.vmem [shape: f32[32,16], index: 5, kind: input, shape index: {}]
  %s6 = inlined_call_operand.vmem [shape: f32[1,16], index: 6, kind: input, shape index: {}]
  %s7 = inlined_call_operand.vmem [shape: f32[64,16], index: 7, kind: output, shape index: {}]
  %s8 = sld [smem:[#allocation0]]
  $region65: #{tpu_custom_call.1} parent=0
    _
  %s10 = ssub.s32 1, %s8
  %s11 = scalar_select 0, %s10, %s8
  loop: start=0, step=1, limit=4
  $region2: #{tpu_custom_call.1} parent=0 // loop_pre_header
    _
  $region3: #{tpu_custom_call.1} parent=0 // loop_header
    %s13 = sphi 0, %s17
    %p14 = scmp.ge.s32.totalorder %s13, 4
    %s21 = sphi 0, %s21
    %s23 = sphi 0, %s21
    %s24 = sphi 0, %s23
    %s38 = sphi 0, %s24
    %s44 = sphi 0, %s46
    %s47 = sphi 0, %s44
    %s48 = sphi 0, %s47
    %s64 = sphi 0, %s48
    %s68 = sphi 0, %s68
    %s70 = sphi 0, %s68
    %s71 = sphi 0, %s70
    %s85 = sphi 0, %s71
    %s89 = sphi 0, %s89
    %s91 = sphi 0, %s89
    %s92 = sphi 0, %s91
    %s106 = sphi 0, %s92
    %s110 = sphi 0, %s110
    %s112 = sphi 0, %s110
    %s113 = sphi 0, %s112
    %s127 = sphi 0, %s113
    %s131 = sphi 0, %s131
    %s133 = sphi 0, %s131
    %s134 = sphi 0, %s133
    %s148 = sphi 0, %s134
    %s152 = sphi 0, %s152
    %s154 = sphi 0, %s152
    %s155 = sphi 0, %s154
    %s169 = sphi 0, %s155
    %s175 = sphi 0, %s177
    %s178 = sphi 0, %s175
    %s179 = sphi 0, %s178
    %s195 = sphi 0, %s179
  $region4: #{tpu_custom_call.1} parent=0 // loop_header_branch
    %16 = sbr.rel (%p14) target = $region8
  $region5: #{tpu_custom_call.1} parent=0 // loop_body
    %s18 = ssub.s32 %s13, 1
    %s19 = ssub.s32 %s13, 2
    %s20 = sadd.s32 %s13, 1
    %s22 = sadd.s32 %s21, 1
    %p25 = scmp.eq.s32.totalorder %s13, 1
    %p26 = scmp.ne.s32.totalorder %s21, %s23
    %p27 = scmp.eq.s32.totalorder %s13, 0
    %p28 = por %p26, %p27
    %p29 = scmp.ne.s32.totalorder %s21, %s23
    %p30 = scmp.eq.s32.totalorder %s18, 1
    %p31 = por %p29, %p30
    %p32 = scmp.ne.s32.totalorder %s23, %s24
    %p33 = scmp.eq.s32.totalorder %s18, 0
    %p34 = por %p32, %p33
    %p35 = scmp.ne.s32.totalorder %s23, %s24
    %p36 = scmp.eq.s32.totalorder %s19, 1
    %p37 = por %p35, %p36
    %p39 = scmp.ne.s32.totalorder %s24, %s38
    %p40 = scmp.eq.s32.totalorder %s19, 0
    %p41 = por %p39, %p40
    %s42 = ssub.s32 %s13, %s20
    %p43 = scmp.eq.s32.totalorder %s42, 0
    %s45 = sadd.s32 %s44, 1
    %s46 = scalar_select %p43, %s44, %s45
    %p49 = pneg %p43
    %p50 = scmp.eq.s32.totalorder %s13, 1
    %p51 = por %p49, %p50
    %p52 = scmp.ne.s32.totalorder %s44, %s47
    %p53 = scmp.eq.s32.totalorder %s13, 0
    %p54 = por %p52, %p53
    %p55 = scmp.ne.s32.totalorder %s44, %s47
    %p56 = scmp.eq.s32.totalorder %s18, 1
    %p57 = por %p55, %p56
    %p58 = scmp.ne.s32.totalorder %s47, %s48
    %p59 = scmp.eq.s32.totalorder %s18, 0
    %p60 = por %p58, %p59
    %p61 = scmp.ne.s32.totalorder %s47, %s48
    %p62 = scmp.eq.s32.totalorder %s19, 1
    %p63 = por %p61, %p62
    %p65 = scmp.ne.s32.totalorder %s48, %s64
    %p66 = scmp.eq.s32.totalorder %s19, 0
    %p67 = por %p65, %p66
    %s69 = sadd.s32 %s68, 1
    %p72 = scmp.eq.s32.totalorder %s13, 1
    %p73 = scmp.ne.s32.totalorder %s68, %s70
    %p74 = scmp.eq.s32.totalorder %s13, 0
    %p75 = por %p73, %p74
    %p76 = scmp.ne.s32.totalorder %s68, %s70
    %p77 = scmp.eq.s32.totalorder %s18, 1
    %p78 = por %p76, %p77
    %p79 = scmp.ne.s32.totalorder %s70, %s71
    %p80 = scmp.eq.s32.totalorder %s18, 0
    %p81 = por %p79, %p80
    %p82 = scmp.ne.s32.totalorder %s70, %s71
    %p83 = scmp.eq.s32.totalorder %s19, 1
    %p84 = por %p82, %p83
    %p86 = scmp.ne.s32.totalorder %s71, %s85
    %p87 = scmp.eq.s32.totalorder %s19, 0
    %p88 = por %p86, %p87
    %s90 = sadd.s32 %s89, 1
    %p93 = scmp.eq.s32.totalorder %s13, 1
    %p94 = scmp.ne.s32.totalorder %s89, %s91
    %p95 = scmp.eq.s32.totalorder %s13, 0
    %p96 = por %p94, %p95
    %p97 = scmp.ne.s32.totalorder %s89, %s91
    %p98 = scmp.eq.s32.totalorder %s18, 1
    %p99 = por %p97, %p98
    %p100 = scmp.ne.s32.totalorder %s91, %s92
    %p101 = scmp.eq.s32.totalorder %s18, 0
    %p102 = por %p100, %p101
    %p103 = scmp.ne.s32.totalorder %s91, %s92
    %p104 = scmp.eq.s32.totalorder %s19, 1
    %p105 = por %p103, %p104
    %p107 = scmp.ne.s32.totalorder %s92, %s106
    %p108 = scmp.eq.s32.totalorder %s19, 0
    %p109 = por %p107, %p108
    %s111 = sadd.s32 %s110, 1
    %p114 = scmp.eq.s32.totalorder %s13, 1
    %p115 = scmp.ne.s32.totalorder %s110, %s112
    %p116 = scmp.eq.s32.totalorder %s13, 0
    %p117 = por %p115, %p116
    %p118 = scmp.ne.s32.totalorder %s110, %s112
    %p119 = scmp.eq.s32.totalorder %s18, 1
    %p120 = por %p118, %p119
    %p121 = scmp.ne.s32.totalorder %s112, %s113
    %p122 = scmp.eq.s32.totalorder %s18, 0
    %p123 = por %p121, %p122
    %p124 = scmp.ne.s32.totalorder %s112, %s113
    %p125 = scmp.eq.s32.totalorder %s19, 1
    %p126 = por %p124, %p125
    %p128 = scmp.ne.s32.totalorder %s113, %s127
    %p129 = scmp.eq.s32.totalorder %s19, 0
    %p130 = por %p128, %p129
    %s132 = sadd.s32 %s131, 1
    %p135 = scmp.eq.s32.totalorder %s13, 1
    %p136 = scmp.ne.s32.totalorder %s131, %s133
    %p137 = scmp.eq.s32.totalorder %s13, 0
    %p138 = por %p136, %p137
    %p139 = scmp.ne.s32.totalorder %s131, %s133
    %p140 = scmp.eq.s32.totalorder %s18, 1
    %p141 = por %p139, %p140
    %p142 = scmp.ne.s32.totalorder %s133, %s134
    %p143 = scmp.eq.s32.totalorder %s18, 0
    %p144 = por %p142, %p143
    %p145 = scmp.ne.s32.totalorder %s133, %s134
    %p146 = scmp.eq.s32.totalorder %s19, 1
    %p147 = por %p145, %p146
    %p149 = scmp.ne.s32.totalorder %s134, %s148
    %p150 = scmp.eq.s32.totalorder %s19, 0
    %p151 = por %p149, %p150
    %s153 = sadd.s32 %s152, 1
    %p156 = scmp.eq.s32.totalorder %s13, 1
    %p157 = scmp.ne.s32.totalorder %s152, %s154
    %p158 = scmp.eq.s32.totalorder %s13, 0
    %p159 = por %p157, %p158
    %p160 = scmp.ne.s32.totalorder %s152, %s154
    %p161 = scmp.eq.s32.totalorder %s18, 1
    %p162 = por %p160, %p161
    %p163 = scmp.ne.s32.totalorder %s154, %s155
    %p164 = scmp.eq.s32.totalorder %s18, 0
    %p165 = por %p163, %p164
    %p166 = scmp.ne.s32.totalorder %s154, %s155
    %p167 = scmp.eq.s32.totalorder %s19, 1
    %p168 = por %p166, %p167
    %p170 = scmp.ne.s32.totalorder %s155, %s169
    %p171 = scmp.eq.s32.totalorder %s19, 0
    %p172 = por %p170, %p171
    %s173 = ssub.s32 %s13, %s20
    %p174 = scmp.eq.s32.totalorder %s173, 0
    %s176 = sadd.s32 %s175, 1
    %s177 = scalar_select %p174, %s175, %s176
    %p180 = pneg %p174
    %p181 = scmp.eq.s32.totalorder %s13, 1
    %p182 = por %p180, %p181
    %p183 = scmp.ne.s32.totalorder %s175, %s178
    %p184 = scmp.eq.s32.totalorder %s13, 0
    %p185 = por %p183, %p184
    %p186 = scmp.ne.s32.totalorder %s175, %s178
    %p187 = scmp.eq.s32.totalorder %s18, 1
    %p188 = por %p186, %p187
    %p189 = scmp.ne.s32.totalorder %s178, %s179
    %p190 = scmp.eq.s32.totalorder %s18, 0
    %p191 = por %p189, %p190
    %p192 = scmp.ne.s32.totalorder %s178, %s179
    %p193 = scmp.eq.s32.totalorder %s19, 1
    %p194 = por %p192, %p193
    %p196 = scmp.ne.s32.totalorder %s179, %s195
    %p197 = scmp.eq.s32.totalorder %s19, 0
    %p198 = por %p196, %p197
    %p199 = scmp.le.s32.totalorder 1, %s13
    %p200 = scmp.lt.s32.totalorder %s13, 3
    %p201 = pnand %p199, %p200
    %p202 = pneg %p201
    // Predicated region
    $region9: #{tpu_custom_call.1} parent=5 // pred_check
      _
    $region10: #{tpu_custom_call.1} parent=5 // pred_check_branch
      %204 = sbr.rel (%p201) target = $region12
    $region11: #{tpu_custom_call.1} parent=5 // pred_region
      %s205 = ssub.s32 %s13, 1
      // Predicated region
      $region13: #{tpu_custom_call.1} parent=11 // pred_check
        %p206 = pneg %p34
      $region14: #{tpu_custom_call.1} parent=11 // pred_check_branch
        %208 = sbr.rel (%p206) target = $region16
      $region15: #{tpu_custom_call.1} parent=11 // pred_region
        _
      $region16: #{tpu_custom_call.1} parent=11 // pred_fallthru
        _
      // Predicated region
      $region17: #{tpu_custom_call.1} parent=11 // pred_check
        %p209 = pneg %p81
      $region18: #{tpu_custom_call.1} parent=11 // pred_check_branch
        %211 = sbr.rel (%p209) target = $region20
      $region19: #{tpu_custom_call.1} parent=11 // pred_region
        _
      $region20: #{tpu_custom_call.1} parent=11 // pred_fallthru
        _
      // Predicated region
      $region21: #{tpu_custom_call.1} parent=11 // pred_check
        %p212 = pneg %p102
      $region22: #{tpu_custom_call.1} parent=11 // pred_check_branch
        %214 = sbr.rel (%p212) target = $region24
      $region23: #{tpu_custom_call.1} parent=11 // pred_region
        _
      $region24: #{tpu_custom_call.1} parent=11 // pred_fallthru
        _
      // Predicated region
      $region25: #{tpu_custom_call.1} parent=11 // pred_check
        %p215 = pneg %p123
      $region26: #{tpu_custom_call.1} parent=11 // pred_check_branch
        %217 = sbr.rel (%p215) target = $region28
      $region27: #{tpu_custom_call.1} parent=11 // pred_region
        _
      $region28: #{tpu_custom_call.1} parent=11 // pred_fallthru
        _
      // Predicated region
      $region29: #{tpu_custom_call.1} parent=11 // pred_check
        %p218 = pneg %p144
      $region30: #{tpu_custom_call.1} parent=11 // pred_check_branch
        %220 = sbr.rel (%p218) target = $region32
      $region31: #{tpu_custom_call.1} parent=11 // pred_region
        _
      $region32: #{tpu_custom_call.1} parent=11 // pred_fallthru
        _
      // Predicated region
      $region33: #{tpu_custom_call.1} parent=11 // pred_check
        %p221 = pneg %p165
      $region34: #{tpu_custom_call.1} parent=11 // pred_check_branch
        %223 = sbr.rel (%p221) target = $region36
      $region35: #{tpu_custom_call.1} parent=11 // pred_region
        _
      $region36: #{tpu_custom_call.1} parent=11 // pred_fallthru
        _
    $region12: #{tpu_custom_call.1} parent=5 // pred_fallthru
      _
    %p224 = scmp.lt.s32.totalorder %s13, 2
    // Predicated region
    $region37: #{tpu_custom_call.1} parent=5 // pred_check
      %p225 = pneg %p224
    $region38: #{tpu_custom_call.1} parent=5 // pred_check_branch
      %227 = sbr.rel (%p225) target = $region40
    $region39: #{tpu_custom_call.1} parent=5 // pred_region
      // Predicated region
      $region41: #{tpu_custom_call.1} parent=39 // pred_check
        %p228 = pneg %p54
      $region42: #{tpu_custom_call.1} parent=39 // pred_check_branch
        %230 = sbr.rel (%p228) target = $region44
      $region43: #{tpu_custom_call.1} parent=39 // pred_region
        %s231 = smul.u32 4, %s13
        %p232 = scmp.lt.s32.totalorder %s231, 7
        %s233 = scalar_select %p232, %s231, 7
        %s234 = smul.addr %s233, 8
        %s235 = scalar_lea.vmem %s1, %s234
        %s236 = smul.u32 4, %s13
      $region44: #{tpu_custom_call.1} parent=39 // pred_fallthru
        _
    $region40: #{tpu_custom_call.1} parent=5 // pred_fallthru
      _
    %p237 = scmp.le.s32.totalorder 1, %s13
    %p238 = scmp.lt.s32.totalorder %s13, 3
    %p239 = pnand %p237, %p238
    %p240 = pneg %p239
    // Predicated region
    $region45: #{tpu_custom_call.1} parent=5 // pred_check
      _
    $region46: #{tpu_custom_call.1} parent=5 // pred_check_branch
      %242 = sbr.rel (%p239) target = $region48
    $region47: #{tpu_custom_call.1} parent=5 // pred_region
      %s243 = ssub.s32 %s13, 1
      %p244 = pneg %p34
      %p245 = pneg %p31
      %s246 = smul.u32 4, %s18
      %p247 = scmp.lt.s32.totalorder %s246, 7
      %s248 = scalar_select %p247, %s246, 7
      %s249 = smul.addr %s248, 8
      %s250 = scalar_lea.vmem %s1, %s249
      %p251 = pneg %p60
      %p252 = pneg %p57
      %p253 = pneg %p81
      %p254 = pneg %p78
      %p255 = pneg %p102
      %p256 = pneg %p99
      %p257 = pneg %p123
      %p258 = pneg %p120
      %p259 = pneg %p144
      %p260 = pneg %p141
      %p261 = pneg %p165
      %p262 = pneg %p162
      %p263 = pneg %p191
      %p264 = pneg %p188
      %s265 = smul.u32 4, %s18
      %p266 = scmp.lt.s32.totalorder %s265, 7
      %s267 = scalar_select %p266, %s265, 7
      %s268 = smul.addr %s267, 8
      %s269 = scalar_lea.vmem %s7, %s268
      %s270 = smul.u32 4, %s18
      %p271 = scmp.lt.s32.totalorder %s270, 7
      %s272 = scalar_select %p271, %s270, 7
      %s273 = smul.addr %s272, 8
      %s274 = scalar_lea.vmem %s1, %s273
      %s275 = smul.u32 4, %s18
      %s276 = smul.u32 4, %s18
      %p277 = scmp.lt.s32.totalorder %s276, 7
      %s278 = scalar_select %p277, %s276, 7
      %s279 = smul.addr %s278, 8
      %s280 = scalar_lea.vmem %s7, %s279
      %s281 = smul.u32 4, %s18
      %p282 = scmp.eq.s32.totalorder %s18, 0
      // Predicated region
      $region49: #{tpu_custom_call.1} parent=47 // pred_check
        %p283 = pneg %p282
      $region50: #{tpu_custom_call.1} parent=47 // pred_check_branch
        %285 = sbr.rel (%p283) target = $region52
      $region51: #{tpu_custom_call.1} parent=47 // pred_region
        %vm286 = vcmask 261120
        %287 = vst.msk [vmem:[#allocation4] sm:$0xff] %vm286, 0.0
        %288 = vst.msk [vmem:[#allocation5] sm:$0xff] %vm286, 0.0
      $region52: #{tpu_custom_call.1} parent=47 // pred_fallthru
        _
      %v289 = vld [vmem:[%s274] sm:$0xff]
      %v290 = vld [vmem:[%s274 + $0x8] sm:$0xff]
      %v291 = vld [vmem:[%s274 + $0x10] sm:$0xff]
      %v292 = vld [vmem:[%s274 + $0x18] sm:$0xff]
      %v293 = vld [vmem:[%s2] sm:$0xff]
      %v294 = vld [vmem:[%s2 + $0x8] sm:$0xff]
      %v295 = vld [vmem:[%s3] sm:$0x1]
      %v297 = vlaneseq
      %v298 = vshrl.u32 %v297, 7
      %v299 = vsub.s32 0, %v298
      %v300 = vrot.slane %v295, %v299
      %vm302 = vcmask 130048
      %v304 = vsel %vm302, %v289, 0
      %v307 = vsel %vm302, %v290, 0
      %v310 = vsel %vm302, %v291, 0
      %v313 = vsel %vm302, %v292, 0
      %315 = vmatprep.subr.mxu0 0.0
      %316 = vmatpush1.msra.mxu0 %v293
      %317 = vmatprep.subr.mxu0 0.0
      %318 = vmatpush1.msra.mxu0 %v294
      %319 = vmatprep.subr.mxu0 0.0
      %320 = vmatpush1.msra.mxu0 0.0
      %321 = vmatprep.subr.mxu0 0.0
      %322 = vmatpush1.msra.mxu0 0.0
      %323 = vmatprep.subr.mxu0 0.0
      %324 = vmatpush1.msra.mxu0 0.0
      %325 = vmatprep.subr.mxu0 0.0
      %326 = vmatpush1.msra.mxu0 0.0
      %327 = vmatprep.subr.mxu0 0.0
      %328 = vmatpush1.msra.mxu0 0.0
      %329 = vmatprep.subr.mxu0 0.0
      %330 = vmatpush1.msra.mxu0 0.0
      %331 = vmatprep.subr.mxu0 0.0
      %332 = vmatpush1.msra.mxu0 0.0
      %333 = vmatprep.subr.mxu0 0.0
      %334 = vmatpush1.msra.mxu0 0.0
      %335 = vmatprep.subr.mxu0 0.0
      %336 = vmatpush1.msra.mxu0 0.0
      %337 = vmatprep.subr.mxu0 0.0
      %338 = vmatpush1.msra.mxu0 0.0
      %339 = vmatprep.subr.mxu0 0.0
      %340 = vmatpush1.msra.mxu0 0.0
      %341 = vmatprep.subr.mxu0 0.0
      %342 = vmatpush1.msra.mxu0 0.0
      %343 = vmatprep.subr.mxu0 0.0
      %344 = vmatpush1.msra.mxu0 0.0
      %345 = vmatprep.subr.mxu0 0.0
      %346 = vmatpush1.msra.mxu0 0.0
      %347 = vmatprep.subr.mxu0 0.0
      %348 = vmatpush1.msra.mxu0 0.0
      %349 = vmatprep.subr.mxu0 0.0
      %350 = vmatpush1.msra.mxu0 0.0
      %351 = vmatprep.subr.mxu0 0.0
      %352 = vmatpush1.msra.mxu0 0.0
      %353 = vmatprep.subr.mxu0 0.0
      %354 = vmatpush1.msra.mxu0 0.0
      %355 = vmatprep.subr.mxu0 0.0
      %356 = vmatpush1.msra.mxu0 0.0
      %357 = vmatprep.subr.mxu0 0.0
      %358 = vmatpush1.msra.mxu0 0.0
      %359 = vmatprep.subr.mxu0 0.0
      %360 = vmatpush1.msra.mxu0 0.0
      %361 = vmatprep.subr.mxu0 0.0
      %362 = vmatpush1.msra.mxu0 0.0
      %363 = vmatprep.subr.mxu0 0.0
      %364 = vmatpush1.msra.mxu0 0.0
      %365 = vmatprep.subr.mxu0 0.0
      %366 = vmatpush1.msra.mxu0 0.0
      %367 = vmatprep.subr.mxu0 0.0
      %368 = vmatpush1.msra.mxu0 0.0
      %369 = vmatprep.subr.mxu0 0.0
      %370 = vmatpush1.msra.mxu0 0.0
      %371 = vmatprep.subr.mxu0 0.0
      %372 = vmatpush1.msra.mxu0 0.0
      %373 = vmatprep.subr.mxu0 0.0
      %374 = vmatpush1.msra.mxu0 0.0
      %375 = vmatprep.subr.mxu0 0.0
      %376 = vmatpush1.msra.mxu0 0.0
      %377 = vmatprep.subr.mxu0 0.0
      %378 = vmatpush1.msra.mxu0 0.0
      %379 = vmatprep.mubr.f32.mxu0 0.0
      %380 = vmatmul.mubr.f32.gmra.mrb[0].mxu0 %v304
      %v381 = vpop.f32.mrb[0].mxu0
      %v382 = vadd.f32 %v300, %v381
      %v383 = vpop.f32.mrb[0].mxu0
      %384 = vmatprep.mubr.f32.mxu0 0.0
      %385 = vmatmul.mubr.f32.gmra.mrb[0].mxu0 %v307
      %v386 = vpop.f32.mrb[0].mxu0
      %v387 = vadd.f32 %v300, %v386
      %v388 = vpop.f32.mrb[0].mxu0
      %389 = vmatprep.mubr.f32.mxu0 0.0
      %390 = vmatmul.mubr.f32.gmra.mrb[0].mxu0 %v310
      %v391 = vpop.f32.mrb[0].mxu0
      %v392 = vadd.f32 %v300, %v391
      %v393 = vpop.f32.mrb[0].mxu0
      %394 = vmatprep.mubr.f32.mxu0 0.0
      %395 = vmatmul.mubr.f32.gmra.mrb[0].mxu0 %v313
      %v396 = vpop.f32.mrb[0].mxu0
      %v397 = vadd.f32 %v300, %v396
      %v398 = vpop.f32.mrb[0].mxu0
      %399 = vdwg.mxu0
      %400 = vst [vmem:[#allocation2] sm:$0xff] %v382
      %401 = vst [vmem:[#allocation2 + $0x8] sm:$0xff] %v387
      %402 = vst [vmem:[#allocation2 + $0x10] sm:$0xff] %v392
      %403 = vst [vmem:[#allocation2 + $0x18] sm:$0xff] %v397
      %v404 = vld [vmem:[%s4] sm:$0xff]
      %v405 = vld [vmem:[%s4 + $0x8] sm:$0xff]
      %v406 = vld [vmem:[%s4 + $0x10] sm:$0xff]
      %v407 = vld [vmem:[%s4 + $0x18] sm:$0xff]
      %v408 = vld [vmem:[%s0] sm:$0xff]
      %409 = vset.pattern.permute.xlu0 0
      %410 = vperm.xlu0 %409, %v408
      %v411 = vpop.permute.xlu0 %410
      %s412 = smul.u32 %s18, 4
      %v413 = vld [vmem:[#allocation4] sm:$0xff]
      %v414 = vld [vmem:[#allocation5] sm:$0xff]
      %v415 = vld [vmem:[#allocation2] sm:$0xff]
      %vm416 = vcmask 261120
      %v418 = vsel %vm416, %v413, 0
      %420 = vmatprep.subr.mxu0 0.0
      %421 = vmatpush1.msra.mxu0 %v404
      %422 = vmatprep.subr.mxu0 0.0
      %423 = vmatpush1.msra.mxu0 %v405
      %424 = vmatprep.subr.mxu0 0.0
      %425 = vmatpush1.msra.mxu0 %v406
      %426 = vmatprep.subr.mxu0 0.0
      %427 = vmatpush1.msra.mxu0 %v407
      %428 = vmatprep.subr.mxu0 0.0
      %429 = vmatpush1.msra.mxu0 0.0
      %430 = vmatprep.subr.mxu0 0.0
      %431 = vmatpush1.msra.mxu0 0.0
      %432 = vmatprep.subr.mxu0 0.0
      %433 = vmatpush1.msra.mxu0 0.0
      %434 = vmatprep.subr.mxu0 0.0
      %435 = vmatpush1.msra.mxu0 0.0
      %436 = vmatprep.subr.mxu0 0.0
      %437 = vmatpush1.msra.mxu0 0.0
      %438 = vmatprep.subr.mxu0 0.0
      %439 = vmatpush1.msra.mxu0 0.0
      %440 = vmatprep.subr.mxu0 0.0
      %441 = vmatpush1.msra.mxu0 0.0
      %442 = vmatprep.subr.mxu0 0.0
      %443 = vmatpush1.msra.mxu0 0.0
      %444 = vmatprep.subr.mxu0 0.0
      %445 = vmatpush1.msra.mxu0 0.0
      %446 = vmatprep.subr.mxu0 0.0
      %447 = vmatpush1.msra.mxu0 0.0
      %448 = vmatprep.subr.mxu0 0.0
      %449 = vmatpush1.msra.mxu0 0.0
      %450 = vmatprep.subr.mxu0 0.0
      %451 = vmatpush1.msra.mxu0 0.0
      %452 = vmatprep.subr.mxu0 0.0
      %453 = vmatpush1.msra.mxu0 0.0
      %454 = vmatprep.subr.mxu0 0.0
      %455 = vmatpush1.msra.mxu0 0.0
      %456 = vmatprep.subr.mxu0 0.0
      %457 = vmatpush1.msra.mxu0 0.0
      %458 = vmatprep.subr.mxu0 0.0
      %459 = vmatpush1.msra.mxu0 0.0
      %460 = vmatprep.subr.mxu0 0.0
      %461 = vmatpush1.msra.mxu0 0.0
      %462 = vmatprep.subr.mxu0 0.0
      %463 = vmatpush1.msra.mxu0 0.0
      %464 = vmatprep.subr.mxu0 0.0
      %465 = vmatpush1.msra.mxu0 0.0
      %466 = vmatprep.subr.mxu0 0.0
      %467 = vmatpush1.msra.mxu0 0.0
      %468 = vmatprep.subr.mxu0 0.0
      %469 = vmatpush1.msra.mxu0 0.0
      %470 = vmatprep.subr.mxu0 0.0
      %471 = vmatpush1.msra.mxu0 0.0
      %472 = vmatprep.subr.mxu0 0.0
      %473 = vmatpush1.msra.mxu0 0.0
      %474 = vmatprep.subr.mxu0 0.0
      %475 = vmatpush1.msra.mxu0 0.0
      %476 = vmatprep.subr.mxu0 0.0
      %477 = vmatpush1.msra.mxu0 0.0
      %478 = vmatprep.subr.mxu0 0.0
      %479 = vmatpush1.msra.mxu0 0.0
      %480 = vmatprep.subr.mxu0 0.0
      %481 = vmatpush1.msra.mxu0 0.0
      %482 = vmatprep.subr.mxu0 0.0
      %483 = vmatpush1.msra.mxu0 0.0
      %484 = vmatprep.mubr.f32.mxu0 0.0
      %485 = vmatmul.mubr.f32.gmra.mrb[0].mxu0 %v418
      %v486 = vpop.f32.mrb[0].mxu0
      %v487 = vadd.f32 0.0, %v486
      %v488 = vpop.f32.mrb[0].mxu0
      %489 = vdwg.mxu0
      %v490 = vadd.f32 %v415, %v487
      %v491 = vxor.u32 %v490, 2147483648
      %v492 = vmul.f32 %v491, 1.442695
      %v493 = vpow.pop %v492
      %v494 = vadd.f32 %v493, 1.0
      %v495 = vrcp.pop %v494
      %v496 = vmul.f32 1.0, %v495
      %v497 = vtanh.pop %v490
      %499 = vrot.lane.b32.xlu0 %v414, 32
      %v500 = vpop.permute.xlu0 %499
      %v502 = vmul.f32 %v496, %v500
      %504 = vrot.lane.b32.xlu0 %v497, 64
      %v505 = vpop.permute.xlu0 %504
      %v507 = vmul.f32 %v496, %v505
      %509 = vrot.lane.b32.xlu0 %v507, 32
      %v510 = vpop.permute.xlu0 %509
      %v512 = vadd.f32 %v502, %v510
      %v513 = vtanh.pop %v512
      %515 = vrot.lane.b32.xlu0 %v513, 64
      %v516 = vpop.permute.xlu0 %515
      %v518 = vmul.f32 %v496, %v516
      %v519 = vstv %s412
      %vm520 = vcmp.lt.s32.totalorder %v519, %v411
      %v521 = vsel %vm520, %v518, 0.0
      %523 = vrot.lane.b32.xlu0 %v521, 32
      %v524 = vpop.permute.xlu0 %523
      %526 = vst.msk [vmem:[#allocation3] sm:$0xff] %vm416, %v524
      %527 = vrot.lane.b32.xlu0 %v413, 96
      %v528 = vpop.permute.xlu0 %527
      %v530 = vsel %vm520, %v518, %v528
      %v531 = vsel %vm520, %v512, %v500
      %s532 = scalar_lea.vmem [#allocation2], 8
      %v533 = vld [vmem:[%s532] sm:$0xff]
      %535 = vrot.lane.b32.xlu0 %v530, 32
      %v536 = vpop.permute.xlu0 %535
      %v537 = vsel %vm416, %v536, 0
      %539 = vmatprep.subr.mxu0 0.0
      %540 = vmatpush1.msra.mxu0 %v404
      %541 = vmatprep.subr.mxu0 0.0
      %542 = vmatpush1.msra.mxu0 %v405
      %543 = vmatprep.subr.mxu0 0.0
      %544 = vmatpush1.msra.mxu0 %v406
      %545 = vmatprep.subr.mxu0 0.0
      %546 = vmatpush1.msra.mxu0 %v407
      %547 = vmatprep.subr.mxu0 0.0
      %548 = vmatpush1.msra.mxu0 0.0
      %549 = vmatprep.subr.mxu0 0.0
      %550 = vmatpush1.msra.mxu0 0.0
      %551 = vmatprep.subr.mxu0 0.0
      %552 = vmatpush1.msra.mxu0 0.0
      %553 = vmatprep.subr.mxu0 0.0
      %554 = vmatpush1.msra.mxu0 0.0
      %555 = vmatprep.subr.mxu0 0.0
      %556 = vmatpush1.msra.mxu0 0.0
      %557 = vmatprep.subr.mxu0 0.0
      %558 = vmatpush1.msra.mxu0 0.0
      %559 = vmatprep.subr.mxu0 0.0
      %560 = vmatpush1.msra.mxu0 0.0
      %561 = vmatprep.subr.mxu0 0.0
      %562 = vmatpush1.msra.mxu0 0.0
      %563 = vmatprep.subr.mxu0 0.0
      %564 = vmatpush1.msra.mxu0 0.0
      %565 = vmatprep.subr.mxu0 0.0
      %566 = vmatpush1.msra.mxu0 0.0
      %567 = vmatprep.subr.mxu0 0.0
      %568 = vmatpush1.msra.mxu0 0.0
      %569 = vmatprep.subr.mxu0 0.0
      %570 = vmatpush1.msra.mxu0 0.0
      %571 = vmatprep.subr.mxu0 0.0
      %572 = vmatpush1.msra.mxu0 0.0
      %573 = vmatprep.subr.mxu0 0.0
      %574 = vmatpush1.msra.mxu0 0.0
      %575 = vmatprep.subr.mxu0 0.0
      %576 = vmatpush1.msra.mxu0 0.0
      %577 = vmatprep.subr.mxu0 0.0
      %578 = vmatpush1.msra.mxu0 0.0
      %579 = vmatprep.subr.mxu0 0.0
      %580 = vmatpush1.msra.mxu0 0.0
      %581 = vmatprep.subr.mxu0 0.0
      %582 = vmatpush1.msra.mxu0 0.0
      %583 = vmatprep.subr.mxu0 0.0
      %584 = vmatpush1.msra.mxu0 0.0
      %585 = vmatprep.subr.mxu0 0.0
      %586 = vmatpush1.msra.mxu0 0.0
      %587 = vmatprep.subr.mxu0 0.0
      %588 = vmatpush1.msra.mxu0 0.0
      %589 = vmatprep.subr.mxu0 0.0
      %590 = vmatpush1.msra.mxu0 0.0
      %591 = vmatprep.subr.mxu0 0.0
      %592 = vmatpush1.msra.mxu0 0.0
      %593 = vmatprep.subr.mxu0 0.0
      %594 = vmatpush1.msra.mxu0 0.0
      %595 = vmatprep.subr.mxu0 0.0
      %596 = vmatpush1.msra.mxu0 0.0
      %597 = vmatprep.subr.mxu0 0.0
      %598 = vmatpush1.msra.mxu0 0.0
      %599 = vmatprep.subr.mxu0 0.0
      %600 = vmatpush1.msra.mxu0 0.0
      %601 = vmatprep.subr.mxu0 0.0
      %602 = vmatpush1.msra.mxu0 0.0
      %603 = vmatprep.mubr.f32.mxu0 0.0
      %604 = vmatmul.mubr.f32.gmra.mrb[0].mxu0 %v537
      %v605 = vpop.f32.mrb[0].mxu0
      %v606 = vadd.f32 0.0, %v605
      %v607 = vpop.f32.mrb[0].mxu0
      %608 = vdwg.mxu0
      %v609 = vadd.f32 %v533, %v606
      %v610 = vxor.u32 %v609, 2147483648
      %v611 = vmul.f32 %v610, 1.442695
      %v612 = vpow.pop %v611
      %v613 = vadd.f32 %v612, 1.0
      %v614 = vrcp.pop %v613
      %v615 = vmul.f32 1.0, %v614
      %v616 = vtanh.pop %v609
      %v617 = vmul.f32 %v615, %v531
      %619 = vrot.lane.b32.xlu0 %v616, 64
      %v620 = vpop.permute.xlu0 %619
      %v622 = vmul.f32 %v615, %v620
      %624 = vrot.lane.b32.xlu0 %v622, 32
      %v625 = vpop.permute.xlu0 %624
      %v627 = vadd.f32 %v617, %v625
      %v628 = vtanh.pop %v627
      %630 = vrot.lane.b32.xlu0 %v628, 64
      %v631 = vpop.permute.xlu0 %630
      %v633 = vmul.f32 %v615, %v631
      %s634 = sadd.s32 %s412, 1
      %v635 = vstv %s634
      %vm636 = vcmp.lt.s32.totalorder %v635, %v411
      %v637 = vsel %vm636, %v633, 0.0
      %639 = vrot.lane.b32.xlu0 %v637, 32
      %v640 = vpop.permute.xlu0 %639
      %s642 = scalar_lea.vmem [#allocation3], 8
      %643 = vst.msk [vmem:[%s642] sm:$0xff] %vm416, %v640
      %v644 = vsel %vm636, %v633, %v530
      %v645 = vsel %vm636, %v627, %v531
      %s646 = scalar_lea.vmem [#allocation2], 16
      %v647 = vld [vmem:[%s646] sm:$0xff]
      %649 = vrot.lane.b32.xlu0 %v644, 32
      %v650 = vpop.permute.xlu0 %649
      %v651 = vsel %vm416, %v650, 0
      %653 = vmatprep.subr.mxu0 0.0
      %654 = vmatpush1.msra.mxu0 %v404
      %655 = vmatprep.subr.mxu0 0.0
      %656 = vmatpush1.msra.mxu0 %v405
      %657 = vmatprep.subr.mxu0 0.0
      %658 = vmatpush1.msra.mxu0 %v406
      %659 = vmatprep.subr.mxu0 0.0
      %660 = vmatpush1.msra.mxu0 %v407
      %661 = vmatprep.subr.mxu0 0.0
      %662 = vmatpush1.msra.mxu0 0.0
      %663 = vmatprep.subr.mxu0 0.0
      %664 = vmatpush1.msra.mxu0 0.0
      %665 = vmatprep.subr.mxu0 0.0
      %666 = vmatpush1.msra.mxu0 0.0
      %667 = vmatprep.subr.mxu0 0.0
      %668 = vmatpush1.msra.mxu0 0.0
      %669 = vmatprep.subr.mxu0 0.0
      %670 = vmatpush1.msra.mxu0 0.0
      %671 = vmatprep.subr.mxu0 0.0
      %672 = vmatpush1.msra.mxu0 0.0
      %673 = vmatprep.subr.mxu0 0.0
      %674 = vmatpush1.msra.mxu0 0.0
      %675 = vmatprep.subr.mxu0 0.0
      %676 = vmatpush1.msra.mxu0 0.0
      %677 = vmatprep.subr.mxu0 0.0
      %678 = vmatpush1.msra.mxu0 0.0
      %679 = vmatprep.subr.mxu0 0.0
      %680 = vmatpush1.msra.mxu0 0.0
      %681 = vmatprep.subr.mxu0 0.0
      %682 = vmatpush1.msra.mxu0 0.0
      %683 = vmatprep.subr.mxu0 0.0
      %684 = vmatpush1.msra.mxu0 0.0
      %685 = vmatprep.subr.mxu0 0.0
      %686 = vmatpush1.msra.mxu0 0.0
      %687 = vmatprep.subr.mxu0 0.0
      %688 = vmatpush1.msra.mxu0 0.0
      %689 = vmatprep.subr.mxu0 0.0
      %690 = vmatpush1.msra.mxu0 0.0
      %691 = vmatprep.subr.mxu0 0.0
      %692 = vmatpush1.msra.mxu0 0.0
      %693 = vmatprep.subr.mxu0 0.0
      %694 = vmatpush1.msra.mxu0 0.0
      %695 = vmatprep.subr.mxu0 0.0
      %696 = vmatpush1.msra.mxu0 0.0
      %697 = vmatprep.subr.mxu0 0.0
      %698 = vmatpush1.msra.mxu0 0.0
      %699 = vmatprep.subr.mxu0 0.0
      %700 = vmatpush1.msra.mxu0 0.0
      %701 = vmatprep.subr.mxu0 0.0
      %702 = vmatpush1.msra.mxu0 0.0
      %703 = vmatprep.subr.mxu0 0.0
      %704 = vmatpush1.msra.mxu0 0.0
      %705 = vmatprep.subr.mxu0 0.0
      %706 = vmatpush1.msra.mxu0 0.0
      %707 = vmatprep.subr.mxu0 0.0
      %708 = vmatpush1.msra.mxu0 0.0
      %709 = vmatprep.subr.mxu0 0.0
      %710 = vmatpush1.msra.mxu0 0.0
      %711 = vmatprep.subr.mxu0 0.0
      %712 = vmatpush1.msra.mxu0 0.0
      %713 = vmatprep.subr.mxu0 0.0
      %714 = vmatpush1.msra.mxu0 0.0
      %715 = vmatprep.subr.mxu0 0.0
      %716 = vmatpush1.msra.mxu0 0.0
      %717 = vmatprep.mubr.f32.mxu0 0.0
      %718 = vmatmul.mubr.f32.gmra.mrb[0].mxu0 %v651
      %v719 = vpop.f32.mrb[0].mxu0
      %v720 = vadd.f32 0.0, %v719
      %v721 = vpop.f32.mrb[0].mxu0
      %722 = vdwg.mxu0
      %v723 = vadd.f32 %v647, %v720
      %v724 = vxor.u32 %v723, 2147483648
      %v725 = vmul.f32 %v724, 1.442695
      %v726 = vpow.pop %v725
      %v727 = vadd.f32 %v726, 1.0
      %v728 = vrcp.pop %v727
      %v729 = vmul.f32 1.0, %v728
      %v730 = vtanh.pop %v723
      %v731 = vmul.f32 %v729, %v645
      %733 = vrot.lane.b32.xlu0 %v730, 64
      %v734 = vpop.permute.xlu0 %733
      %v736 = vmul.f32 %v729, %v734
      %738 = vrot.lane.b32.xlu0 %v736, 32
      %v739 = vpop.permute.xlu0 %738
      %v741 = vadd.f32 %v731, %v739
      %v742 = vtanh.pop %v741
      %744 = vrot.lane.b32.xlu0 %v742, 64
      %v745 = vpop.permute.xlu0 %744
      %v747 = vmul.f32 %v729, %v745
      %s748 = sadd.s32 %s412, 2
      %v749 = vstv %s748
      %vm750 = vcmp.lt.s32.totalorder %v749, %v411
      %v751 = vsel %vm750, %v747, 0.0
      %753 = vrot.lane.b32.xlu0 %v751, 32
      %v754 = vpop.permute.xlu0 %753
      %s756 = scalar_lea.vmem [#allocation3], 16
      %757 = vst.msk [vmem:[%s756] sm:$0xff] %vm416, %v754
      %v758 = vsel %vm750, %v747, %v644
      %v759 = vsel %vm750, %v741, %v645
      %s760 = scalar_lea.vmem [#allocation2], 24
      %v761 = vld [vmem:[%s760] sm:$0xff]
      %763 = vrot.lane.b32.xlu0 %v758, 32
      %v764 = vpop.permute.xlu0 %763
      %v765 = vsel %vm416, %v764, 0
      %767 = vmatprep.subr.mxu0 0.0
      %768 = vmatpush1.msra.mxu0 %v404
      %769 = vmatprep.subr.mxu0 0.0
      %770 = vmatpush1.msra.mxu0 %v405
      %771 = vmatprep.subr.mxu0 0.0
      %772 = vmatpush1.msra.mxu0 %v406
      %773 = vmatprep.subr.mxu0 0.0
      %774 = vmatpush1.msra.mxu0 %v407
      %775 = vmatprep.subr.mxu0 0.0
      %776 = vmatpush1.msra.mxu0 0.0
      %777 = vmatprep.subr.mxu0 0.0
      %778 = vmatpush1.msra.mxu0 0.0
      %779 = vmatprep.subr.mxu0 0.0
      %780 = vmatpush1.msra.mxu0 0.0
      %781 = vmatprep.subr.mxu0 0.0
      %782 = vmatpush1.msra.mxu0 0.0
      %783 = vmatprep.subr.mxu0 0.0
      %784 = vmatpush1.msra.mxu0 0.0
      %785 = vmatprep.subr.mxu0 0.0
      %786 = vmatpush1.msra.mxu0 0.0
      %787 = vmatprep.subr.mxu0 0.0
      %788 = vmatpush1.msra.mxu0 0.0
      %789 = vmatprep.subr.mxu0 0.0
      %790 = vmatpush1.msra.mxu0 0.0
      %791 = vmatprep.subr.mxu0 0.0
      %792 = vmatpush1.msra.mxu0 0.0
      %793 = vmatprep.subr.mxu0 0.0
      %794 = vmatpush1.msra.mxu0 0.0
      %795 = vmatprep.subr.mxu0 0.0
      %796 = vmatpush1.msra.mxu0 0.0
      %797 = vmatprep.subr.mxu0 0.0
      %798 = vmatpush1.msra.mxu0 0.0
      %799 = vmatprep.subr.mxu0 0.0
      %800 = vmatpush1.msra.mxu0 0.0
      %801 = vmatprep.subr.mxu0 0.0
      %802 = vmatpush1.msra.mxu0 0.0
      %803 = vmatprep.subr.mxu0 0.0
      %804 = vmatpush1.msra.mxu0 0.0
      %805 = vmatprep.subr.mxu0 0.0
      %806 = vmatpush1.msra.mxu0 0.0
      %807 = vmatprep.subr.mxu0 0.0
      %808 = vmatpush1.msra.mxu0 0.0
      %809 = vmatprep.subr.mxu0 0.0
      %810 = vmatpush1.msra.mxu0 0.0
      %811 = vmatprep.subr.mxu0 0.0
      %812 = vmatpush1.msra.mxu0 0.0
      %813 = vmatprep.subr.mxu0 0.0
      %814 = vmatpush1.msra.mxu0 0.0
      %815 = vmatprep.subr.mxu0 0.0
      %816 = vmatpush1.msra.mxu0 0.0
      %817 = vmatprep.subr.mxu0 0.0
      %818 = vmatpush1.msra.mxu0 0.0
      %819 = vmatprep.subr.mxu0 0.0
      %820 = vmatpush1.msra.mxu0 0.0
      %821 = vmatprep.subr.mxu0 0.0
      %822 = vmatpush1.msra.mxu0 0.0
      %823 = vmatprep.subr.mxu0 0.0
      %824 = vmatpush1.msra.mxu0 0.0
      %825 = vmatprep.subr.mxu0 0.0
      %826 = vmatpush1.msra.mxu0 0.0
      %827 = vmatprep.subr.mxu0 0.0
      %828 = vmatpush1.msra.mxu0 0.0
      %829 = vmatprep.subr.mxu0 0.0
      %830 = vmatpush1.msra.mxu0 0.0
      %831 = vmatprep.mubr.f32.mxu0 0.0
      %832 = vmatmul.mubr.f32.gmra.mrb[0].mxu0 %v765
      %v833 = vpop.f32.mrb[0].mxu0
      %v834 = vadd.f32 0.0, %v833
      %v835 = vpop.f32.mrb[0].mxu0
      %836 = vdwg.mxu0
      %v837 = vadd.f32 %v761, %v834
      %v838 = vxor.u32 %v837, 2147483648
      %v839 = vmul.f32 %v838, 1.442695
      %v840 = vpow.pop %v839
      %v841 = vadd.f32 %v840, 1.0
      %v842 = vrcp.pop %v841
      %v843 = vmul.f32 1.0, %v842
      %v844 = vtanh.pop %v837
      %v845 = vmul.f32 %v843, %v759
      %847 = vrot.lane.b32.xlu0 %v844, 64
      %v848 = vpop.permute.xlu0 %847
      %v850 = vmul.f32 %v843, %v848
      %852 = vrot.lane.b32.xlu0 %v850, 32
      %v853 = vpop.permute.xlu0 %852
      %v855 = vadd.f32 %v845, %v853
      %v856 = vtanh.pop %v855
      %858 = vrot.lane.b32.xlu0 %v856, 64
      %v859 = vpop.permute.xlu0 %858
      %v861 = vmul.f32 %v843, %v859
      %s862 = sadd.s32 %s412, 3
      %v863 = vstv %s862
      %vm864 = vcmp.lt.s32.totalorder %v863, %v411
      %v865 = vsel %vm864, %v861, 0.0
      %867 = vrot.lane.b32.xlu0 %v865, 32
      %v868 = vpop.permute.xlu0 %867
      %s870 = scalar_lea.vmem [#allocation3], 24
      %871 = vst.msk [vmem:[%s870] sm:$0xff] %vm416, %v868
      %v872 = vsel %vm864, %v861, %v758
      %v873 = vsel %vm864, %v855, %v759
      %875 = vrot.lane.b32.xlu0 %v872, 32
      %v876 = vpop.permute.xlu0 %875
      %878 = vst.msk [vmem:[#allocation4] sm:$0xff] %vm416, %v876
      %880 = vrot.lane.b32.xlu0 %v873, 96
      %v881 = vpop.permute.xlu0 %880
      %883 = vst.msk [vmem:[#allocation5] sm:$0xff] %vm416, %v881
      %v884 = vld [vmem:[#allocation3] sm:$0xff]
      %v885 = vld [vmem:[#allocation3 + $0x8] sm:$0xff]
      %v886 = vld [vmem:[#allocation3 + $0x10] sm:$0xff]
      %v887 = vld [vmem:[#allocation3 + $0x18] sm:$0xff]
      %v888 = vld [vmem:[%s5] sm:$0xff]
      %v889 = vld [vmem:[%s5 + $0x8] sm:$0xff]
      %v890 = vld [vmem:[%s5 + $0x10] sm:$0xff]
      %v891 = vld [vmem:[%s5 + $0x18] sm:$0xff]
      %v892 = vld [vmem:[%s6] sm:$0x1]
      %v894 = vlaneseq
      %v895 = vshrl.u32 %v894, 7
      %v896 = vsub.s32 0, %v895
      %v897 = vrot.slane %v892, %v896
      %v900 = vsel %vm416, %v884, 0
      %v903 = vsel %vm416, %v885, 0
      %v906 = vsel %vm416, %v886, 0
      %v909 = vsel %vm416, %v887, 0
      %911 = vmatprep.subr.mxu0 0.0
      %912 = vmatpush1.msra.mxu0 %v888
      %913 = vmatprep.subr.mxu0 0.0
      %914 = vmatpush1.msra.mxu0 %v889
      %915 = vmatprep.subr.mxu0 0.0
      %916 = vmatpush1.msra.mxu0 %v890
      %917 = vmatprep.subr.mxu0 0.0
      %918 = vmatpush1.msra.mxu0 %v891
      %919 = vmatprep.subr.mxu0 0.0
      %920 = vmatpush1.msra.mxu0 0.0
      %921 = vmatprep.subr.mxu0 0.0
      %922 = vmatpush1.msra.mxu0 0.0
      %923 = vmatprep.subr.mxu0 0.0
      %924 = vmatpush1.msra.mxu0 0.0
      %925 = vmatprep.subr.mxu0 0.0
      %926 = vmatpush1.msra.mxu0 0.0
      %927 = vmatprep.subr.mxu0 0.0
      %928 = vmatpush1.msra.mxu0 0.0
      %929 = vmatprep.subr.mxu0 0.0
      %930 = vmatpush1.msra.mxu0 0.0
      %931 = vmatprep.subr.mxu0 0.0
      %932 = vmatpush1.msra.mxu0 0.0
      %933 = vmatprep.subr.mxu0 0.0
      %934 = vmatpush1.msra.mxu0 0.0
      %935 = vmatprep.subr.mxu0 0.0
      %936 = vmatpush1.msra.mxu0 0.0
      %937 = vmatprep.subr.mxu0 0.0
      %938 = vmatpush1.msra.mxu0 0.0
      %939 = vmatprep.subr.mxu0 0.0
      %940 = vmatpush1.msra.mxu0 0.0
      %941 = vmatprep.subr.mxu0 0.0
      %942 = vmatpush1.msra.mxu0 0.0
      %943 = vmatprep.subr.mxu0 0.0
      %944 = vmatpush1.msra.mxu0 0.0
      %945 = vmatprep.subr.mxu0 0.0
      %946 = vmatpush1.msra.mxu0 0.0
      %947 = vmatprep.subr.mxu0 0.0
      %948 = vmatpush1.msra.mxu0 0.0
      %949 = vmatprep.subr.mxu0 0.0
      %950 = vmatpush1.msra.mxu0 0.0
      %951 = vmatprep.subr.mxu0 0.0
      %952 = vmatpush1.msra.mxu0 0.0
      %953 = vmatprep.subr.mxu0 0.0
      %954 = vmatpush1.msra.mxu0 0.0
      %955 = vmatprep.subr.mxu0 0.0
      %956 = vmatpush1.msra.mxu0 0.0
      %957 = vmatprep.subr.mxu0 0.0
      %958 = vmatpush1.msra.mxu0 0.0
      %959 = vmatprep.subr.mxu0 0.0
      %960 = vmatpush1.msra.mxu0 0.0
      %961 = vmatprep.subr.mxu0 0.0
      %962 = vmatpush1.msra.mxu0 0.0
      %963 = vmatprep.subr.mxu0 0.0
      %964 = vmatpush1.msra.mxu0 0.0
      %965 = vmatprep.subr.mxu0 0.0
      %966 = vmatpush1.msra.mxu0 0.0
      %967 = vmatprep.subr.mxu0 0.0
      %968 = vmatpush1.msra.mxu0 0.0
      %969 = vmatprep.subr.mxu0 0.0
      %970 = vmatpush1.msra.mxu0 0.0
      %971 = vmatprep.subr.mxu0 0.0
      %972 = vmatpush1.msra.mxu0 0.0
      %973 = vmatprep.subr.mxu0 0.0
      %974 = vmatpush1.msra.mxu0 0.0
      %975 = vmatprep.mubr.f32.mxu0 0.0
      %976 = vmatmul.mubr.f32.gmra.mrb[0].mxu0 %v900
      %v977 = vpop.f32.mrb[0].mxu0
      %v978 = vadd.f32 %v897, %v977
      %v979 = vpop.f32.mrb[0].mxu0
      %980 = vmatprep.mubr.f32.mxu0 0.0
      %981 = vmatmul.mubr.f32.gmra.mrb[0].mxu0 %v903
      %v982 = vpop.f32.mrb[0].mxu0
      %v983 = vadd.f32 %v897, %v982
      %v984 = vpop.f32.mrb[0].mxu0
      %985 = vmatprep.mubr.f32.mxu0 0.0
      %986 = vmatmul.mubr.f32.gmra.mrb[0].mxu0 %v906
      %v987 = vpop.f32.mrb[0].mxu0
      %v988 = vadd.f32 %v897, %v987
      %v989 = vpop.f32.mrb[0].mxu0
      %990 = vmatprep.mubr.f32.mxu0 0.0
      %991 = vmatmul.mubr.f32.gmra.mrb[0].mxu0 %v909
      %v992 = vpop.f32.mrb[0].mxu0
      %v993 = vadd.f32 %v897, %v992
      %v994 = vpop.f32.mrb[0].mxu0
      %995 = vdwg.mxu0
      %996 = vst.msk [vmem:[%s280] sm:$0xff] %vm302, %v978
      %997 = vst.msk [vmem:[%s280 + $0x8] sm:$0xff] %vm302, %v983
      %998 = vst.msk [vmem:[%s280 + $0x10] sm:$0xff] %vm302, %v988
      %999 = vst.msk [vmem:[%s280 + $0x18] sm:$0xff] %vm302, %v993
      %s1000 = smul.u32 4, %s18
      %p1001 = scmp.lt.s32.totalorder %s1000, 7
      %s1002 = scalar_select %p1001, %s1000, 7
      %s1003 = smul.addr %s1002, 8
      %s1004 = scalar_lea.vmem %s7, %s1003
      // Predicated region
      $region53: #{tpu_custom_call.1} parent=47 // pred_check
        %p1005 = pneg %p188
      $region54: #{tpu_custom_call.1} parent=47 // pred_check_branch
        %1007 = sbr.rel (%p1005) target = $region56
      $region55: #{tpu_custom_call.1} parent=47 // pred_region
        %s1008 = smul.u32 4, %s18
      $region56: #{tpu_custom_call.1} parent=47 // pred_fallthru
        _
    $region48: #{tpu_custom_call.1} parent=5 // pred_fallthru
      _
    %p1009 = scmp.le.s32.totalorder 2, %s13
    // Predicated region
    $region57: #{tpu_custom_call.1} parent=5 // pred_check
      %p1010 = pneg %p1009
    $region58: #{tpu_custom_call.1} parent=5 // pred_check_branch
      %1012 = sbr.rel (%p1010) target = $region60
    $region59: #{tpu_custom_call.1} parent=5 // pred_region
      %s1013 = ssub.s32 %s13, 2
      // Predicated region
      $region61: #{tpu_custom_call.1} parent=59 // pred_check
        %p1014 = pneg %p194
      $region62: #{tpu_custom_call.1} parent=59 // pred_check_branch
        %1016 = sbr.rel (%p1014) target = $region64
      $region63: #{tpu_custom_call.1} parent=59 // pred_region
        %s1017 = smul.u32 4, %s19
        %p1018 = scmp.lt.s32.totalorder %s1017, 7
        %s1019 = scalar_select %p1018, %s1017, 7
        %s1020 = smul.addr %s1019, 8
        %s1021 = scalar_lea.vmem %s7, %s1020
      $region64: #{tpu_custom_call.1} parent=59 // pred_fallthru
        _
    $region60: #{tpu_custom_call.1} parent=5 // pred_fallthru
      _
  $region6: #{tpu_custom_call.1} parent=0 // loop_footer
    %s17 = sadd.s32 1, %s13
  $region7: #{tpu_custom_call.1} parent=0 // loop_footer_branch
    %12 = sbr.rel target = $region3
  $region8: #{tpu_custom_call.1} parent=0 // loop_exit
    _

</llo_original>
